<compile_context>
chip_gen: v5e
topology: v5e:2x2
jax: 0.10.0
libtpu: 0.0.40
codegen_flags: <defaults>
</compile_context>

<pallas_src>
from functools import partial

import jax
import jax.numpy as jnp
from jax.experimental import pallas as pl
from jax.experimental.pallas import tpu as pltpu

# Older JAX releases used a different class name; keep the kernel runnable on both.
_CompilerParams = getattr(pltpu, "CompilerParams", None) or getattr(pltpu, "TPUCompilerParams")


def conv1d_kernel(x_ref, halo_ref, w_ref, o_ref, xw_ref, *, k, pad, tile_l):
    """One grid step = one (batch element, L-tile).

    x_ref:    (1, tile_l, H_in)       current sequence tile (compute dtype)
    halo_ref: (1, 1, halo_w, H_in)    [left pad rows | right pad rows] of this tile
    w_ref:    (k, H_in, H_out)        per-tap weights (compute dtype)
    o_ref:    (1, tile_l, H_out)      output tile (x dtype, f32)
    xw_ref:   (tile_l + 2*pad, H_in)  VMEM scratch: assembled halo'd window
    """
    # Assemble the halo'd window in VMEM: [left halo | tile | right halo].
    xw_ref[pad:pad + tile_l, :] = x_ref[0]
    if pad > 0:
        halo = halo_ref[0, 0]                       # (2*pad, H_in)
        xw_ref[0:pad, :] = halo[:pad]               # rows just before this tile
        xw_ref[pad + tile_l:, :] = halo[pad:]       # rows just after this tile

    # k accumulated MXU matmuls (no im2col concat slab), f32 accumulation.
    acc = jnp.dot(xw_ref[0:tile_l, :], w_ref[0], preferred_element_type=jnp.float32)
    for t in range(1, k):
        acc = acc + jnp.dot(xw_ref[t:t + tile_l, :], w_ref[t],
                            preferred_element_type=jnp.float32)

    # Single store per tile.
    o_ref[0] = acc.astype(o_ref.dtype)


def _pick_tile_l(L, target):
    """Largest divisor of L that is <= target and a multiple of 8 (or L itself)."""
    t = min(L, max(int(target), 1))
    for cand in range(t, 0, -1):
        if L % cand == 0 and (cand % 8 == 0 or cand == L):
            return cand
    return L


def _build_halos(x, num_l, tile_l, pad):
    """halos[b, j, :pad] = rows just before tile j; halos[b, j, pad:] = rows just after.

    Zero rows at the sequence ends (reproduces Conv1d's padding=(k-1)//2).
    Only 2*pad rows per tile are materialized — x is otherwise untouched.
    """
    B, L, H = x.shape
    if pad == 0:
        return jnp.zeros((B, num_l, 1, H), x.dtype)  # dummy, never read
    xt = x.reshape(B, num_l, tile_l, H)
    zpad = jnp.zeros((B, 1, pad, H), x.dtype)
    left = jnp.concatenate([zpad, xt[:, :-1, tile_l - pad:, :]], axis=1)   # (B, num_l, pad, H)
    right = jnp.concatenate([xt[:, 1:, :pad, :], zpad], axis=1)            # (B, num_l, pad, H)
    return jnp.concatenate([left, right], axis=2)                          # (B, num_l, 2*pad, H)


def cnn_forward(x, weight, *, tile_l=256, compute_dtype=None):
    """x: (B, L, H) ; weight: PyTorch Conv1d weight (H_out, H_in, k)."""
    B, L, H = x.shape
    H_out, H_in, k = weight.shape
    assert H == H_in
    # PyTorch Conv1d with padding=(k-1)//2 only preserves length for odd k.
    assert k % 2 == 1, "kernel_size must be odd to keep output length == L"
    pad = (k - 1) // 2
    cdt = jnp.dtype(compute_dtype) if compute_dtype is not None else x.dtype

    tile_l = _pick_tile_l(L, tile_l)
    if tile_l != L and tile_l < pad:   # halo must fit inside one neighbouring tile
        tile_l = L
    assert L % tile_l == 0
    num_l = L // tile_l

    # Weight: (H_out, H_in, k) -> (k, H_in, H_out), cast to compute dtype.
    # TODO(synk): precompute once at parameter-load time in a real model.
    w = jnp.transpose(weight, (2, 1, 0)).astype(cdt)

    x_c = x.astype(cdt)
    halos = _build_halos(x_c, num_l, tile_l, pad)
    halo_w = halos.shape[2]

    # Per-step VMEM footprint -> scoped VMEM limit (double-buffered operands,
    # f32 accumulator, assembled-window scratch), clamped to [16 MiB, 64 MiB].
    isz = jnp.dtype(cdt).itemsize
    osz = jnp.dtype(x.dtype).itemsize
    per_step = ((tile_l * H_in + halo_w * H_in + k * H_in * H_out) * isz
                + tile_l * H_out * osz
                + (tile_l + 2 * pad) * H_in * isz
                + tile_l * H_out * 4)
    vmem_limit = int(min(max(4 * per_step, 16 * 1024 * 1024), 64 * 1024 * 1024))

    kernel = partial(conv1d_kernel, k=k, pad=pad, tile_l=tile_l)
    return pl.pallas_call(
        kernel,
        out_shape=jax.ShapeDtypeStruct((B, L, H_out), x.dtype),
        grid_spec=pltpu.PrefetchScalarGridSpec(
            num_scalar_prefetch=0,
            grid=(B, num_l),
            in_specs=[
                pl.BlockSpec((1, tile_l, H_in), lambda b, j: (b, j, 0)),
                pl.BlockSpec((1, 1, halo_w, H_in), lambda b, j: (b, j, 0, 0)),
                pl.BlockSpec((k, H_in, H_out), lambda b, j: (0, 0, 0)),
            ],
            out_specs=pl.BlockSpec((1, tile_l, H_out), lambda b, j: (b, j, 0)),
            scratch_shapes=[pltpu.VMEM((tile_l + 2 * pad, H_in), cdt)],
        ),
        compiler_params=_CompilerParams(
            dimension_semantics=("parallel", "parallel"),
            vmem_limit_bytes=vmem_limit,
        ),
    )(x_c, halos, w)


if __name__ == "__main__":
    # config = {'hidden_size': 32, 'kernel_size': 3}
    hidden_size = 32
    kernel_size = 3
    batch, seq = 2, 128          # small, but >1 L-tile so the halo path is exercised

    key = jax.random.PRNGKey(0)
    kx, kw = jax.random.split(key)
    # forward convention of the module: (batch, seq_len, hidden_size)
    x = jax.random.normal(kx, (batch, seq, hidden_size), dtype=jnp.float32)
    bound = 1.0 / (hidden_size * kernel_size) ** 0.5
    weight = jax.random.uniform(
        kw, (hidden_size, hidden_size, kernel_size),
        minval=-bound, maxval=bound, dtype=jnp.float32)

    pad = (kernel_size - 1) // 2
    ref = jax.lax.conv_general_dilated(
        x, jnp.transpose(weight, (2, 1, 0)),
        window_strides=(1,), padding=[(pad, pad)],
        dimension_numbers=("NWC", "WIO", "NWC"))

    # f32 path (exact semantics of the PyTorch module).
    out = jax.block_until_ready(cnn_forward(x, weight, tile_l=64))
    assert out.shape == (batch, seq, hidden_size)
    assert jnp.allclose(out, ref, atol=1e-4, rtol=1e-4)

    # bf16-input path (f32 accumulation) — the recommended v6e/v7x configuration.
    out_bf16 = jax.block_until_ready(
        cnn_forward(x, weight, tile_l=64, compute_dtype=jnp.bfloat16))
    assert out_bf16.shape == (batch, seq, hidden_size)
    assert jnp.allclose(out_bf16, ref, atol=3e-2, rtol=3e-2)

    print("KERNEL_OK")
</pallas_src>

<mosaic_0001>
module attributes {stable_mosaic.version = 11 : i64} {
  func.func @conv1d_kernel(%arg0: i32, %arg1: i32, %arg2: memref<1x64x32xf32, #tpu.memory_space<vmem>>, %arg3: memref<1x1x2x32xf32, #tpu.memory_space<vmem>>, %arg4: memref<3x32x32xf32, #tpu.memory_space<vmem>>, %arg5: memref<1x64x32xf32, #tpu.memory_space<vmem>>, %arg6: memref<66x32xf32, #tpu.memory_space<vmem>>) attributes {dimension_semantics = [#tpu.dimension_semantics<parallel>, #tpu.dimension_semantics<parallel>], iteration_bounds = array<i64: 2, 2>, scalar_prefetch = 0 : i64, scratch_operands = 1 : i64, tpu.core_type = #tpu.core_type<tc>, window_params = [{transform_indices = @transform_0, window_bounds = array<i64: 1, 64, 32>}, {transform_indices = @transform_1, window_bounds = array<i64: 1, 1, 2, 32>}, {pipeline_mode = #tpu.pipeline_mode<synchronous>, transform_indices = @transform_2, window_bounds = array<i64: 3, 32, 32>}, {transform_indices = @transform_3, window_bounds = array<i64: 1, 64, 32>}]} {
    %c0 = arith.constant 0 : index
    %c0_0 = arith.constant 0 : index
    %c0_1 = arith.constant 0 : index
    %0 = vector.load %arg2[%c0, %c0_0, %c0_1] : memref<1x64x32xf32, #tpu.memory_space<vmem>>, vector<1x64x32xf32>
    %1 = vector.shape_cast %0 : vector<1x64x32xf32> to vector<64x32xf32>
    %c1 = arith.constant 1 : index
    %c0_2 = arith.constant 0 : index
    %2 = vector.load %arg6[%c1, %c0_2] : memref<66x32xf32, #tpu.memory_space<vmem>>, vector<64x32xf32>
    tpu.vector_store %arg6[%c1, %c0_2], %1 {strides = array<i32>} : memref<66x32xf32, #tpu.memory_space<vmem>>, vector<64x32xf32>,
    %c0_3 = arith.constant 0 : index
    %c0_4 = arith.constant 0 : index
    %c0_5 = arith.constant 0 : index
    %c0_6 = arith.constant 0 : index
    %3 = vector.load %arg3[%c0_3, %c0_4, %c0_5, %c0_6] : memref<1x1x2x32xf32, #tpu.memory_space<vmem>>, vector<1x1x2x32xf32>
    %4 = vector.shape_cast %3 : vector<1x1x2x32xf32> to vector<2x32xf32>
    %5 = vector.extract_strided_slice %4 {offsets = [0, 0], sizes = [1, 32], strides = [1, 1]} : vector<2x32xf32> to vector<1x32xf32>
    %c0_7 = arith.constant 0 : index
    %c0_8 = arith.constant 0 : index
    %6 = vector.load %arg6[%c0_7, %c0_8] : memref<66x32xf32, #tpu.memory_space<vmem>>, vector<1x32xf32>
    tpu.vector_store %arg6[%c0_7, %c0_8], %5 {strides = array<i32>} : memref<66x32xf32, #tpu.memory_space<vmem>>, vector<1x32xf32>,
    %7 = vector.extract_strided_slice %4 {offsets = [1, 0], sizes = [1, 32], strides = [1, 1]} : vector<2x32xf32> to vector<1x32xf32>
    %c65 = arith.constant 65 : index
    %c0_9 = arith.constant 0 : index
    %8 = vector.load %arg6[%c65, %c0_9] : memref<66x32xf32, #tpu.memory_space<vmem>>, vector<1x32xf32>
    tpu.vector_store %arg6[%c65, %c0_9], %7 {strides = array<i32>} : memref<66x32xf32, #tpu.memory_space<vmem>>, vector<1x32xf32>,
    %c0_10 = arith.constant 0 : index
    %c0_11 = arith.constant 0 : index
    %9 = vector.load %arg6[%c0_10, %c0_11] : memref<66x32xf32, #tpu.memory_space<vmem>>, vector<64x32xf32>
    %c0_12 = arith.constant 0 : index
    %c0_13 = arith.constant 0 : index
    %c0_14 = arith.constant 0 : index
    %10 = vector.load %arg4[%c0_12, %c0_13, %c0_14] : memref<3x32x32xf32, #tpu.memory_space<vmem>>, vector<1x32x32xf32>
    %11 = vector.shape_cast %10 : vector<1x32x32xf32> to vector<32x32xf32>
    %cst = arith.constant dense<0.000000e+00> : vector<64x32xf32>
    %12 = tpu.matmul %9, %11, %cst {dimension_numbers = #tpu.dot_dimension_numbers<[1], [0], [0], [1], [0, 0, 1, 1], [], []>} : vector<64x32xf32>, vector<32x32xf32>, vector<64x32xf32> -> vector<64x32xf32>
    %c1_15 = arith.constant 1 : index
    %c0_16 = arith.constant 0 : index
    %13 = vector.load %arg6[%c1_15, %c0_16] : memref<66x32xf32, #tpu.memory_space<vmem>>, vector<64x32xf32>
    %c1_17 = arith.constant 1 : index
    %c0_18 = arith.constant 0 : index
    %c0_19 = arith.constant 0 : index
    %14 = vector.load %arg4[%c1_17, %c0_18, %c0_19] : memref<3x32x32xf32, #tpu.memory_space<vmem>>, vector<1x32x32xf32>
    %15 = vector.shape_cast %14 : vector<1x32x32xf32> to vector<32x32xf32>
    %cst_20 = arith.constant dense<0.000000e+00> : vector<64x32xf32>
    %16 = tpu.matmul %13, %15, %cst_20 {dimension_numbers = #tpu.dot_dimension_numbers<[1], [0], [0], [1], [0, 0, 1, 1], [], []>} : vector<64x32xf32>, vector<32x32xf32>, vector<64x32xf32> -> vector<64x32xf32>
    %17 = arith.addf %12, %16 : vector<64x32xf32>
    %c2 = arith.constant 2 : index
    %c0_21 = arith.constant 0 : index
    %18 = vector.load %arg6[%c2, %c0_21] : memref<66x32xf32, #tpu.memory_space<vmem>>, vector<64x32xf32>
    %c2_22 = arith.constant 2 : index
    %c0_23 = arith.constant 0 : index
    %c0_24 = arith.constant 0 : index
    %19 = vector.load %arg4[%c2_22, %c0_23, %c0_24] : memref<3x32x32xf32, #tpu.memory_space<vmem>>, vector<1x32x32xf32>
    %20 = vector.shape_cast %19 : vector<1x32x32xf32> to vector<32x32xf32>
    %cst_25 = arith.constant dense<0.000000e+00> : vector<64x32xf32>
    %21 = tpu.matmul %18, %20, %cst_25 {dimension_numbers = #tpu.dot_dimension_numbers<[1], [0], [0], [1], [0, 0, 1, 1], [], []>} : vector<64x32xf32>, vector<32x32xf32>, vector<64x32xf32> -> vector<64x32xf32>
    %22 = arith.addf %17, %21 : vector<64x32xf32>
    %c0_26 = arith.constant 0 : index
    %c0_27 = arith.constant 0 : index
    %c0_28 = arith.constant 0 : index
    %23 = vector.load %arg5[%c0_26, %c0_27, %c0_28] : memref<1x64x32xf32, #tpu.memory_space<vmem>>, vector<1x64x32xf32>
    %24 = vector.shape_cast %23 : vector<1x64x32xf32> to vector<64x32xf32>
    %25 = vector.shape_cast %22 : vector<64x32xf32> to vector<1x64x32xf32>
    tpu.vector_store %arg5[%c0_26, %c0_27, %c0_28], %25 {strides = array<i32>} : memref<1x64x32xf32, #tpu.memory_space<vmem>>, vector<1x64x32xf32>,
    return
  }
  func.func @transform_0(%arg0: i32, %arg1: i32) -> (i32, i32, i32) {
    %c0_i32 = arith.constant 0 : i32
    %c0_i32_0 = arith.constant 0 : i32
    return %arg0, %arg1, %c0_i32 : i32, i32, i32
  }
  func.func @transform_1(%arg0: i32, %arg1: i32) -> (i32, i32, i32, i32) {
    %c0_i32 = arith.constant 0 : i32
    %c0_i32_0 = arith.constant 0 : i32
    %c0_i32_1 = arith.constant 0 : i32
    return %arg0, %arg1, %c0_i32, %c0_i32_0 : i32, i32, i32, i32
  }
  func.func @transform_2(%arg0: i32, %arg1: i32) -> (i32, i32, i32) {
    %c0_i32 = arith.constant 0 : i32
    %c0_i32_0 = arith.constant 0 : i32
    %c0_i32_1 = arith.constant 0 : i32
    %c0_i32_2 = arith.constant 0 : i32
    return %c0_i32, %c0_i32_0, %c0_i32_1 : i32, i32, i32
  }
  func.func @transform_3(%arg0: i32, %arg1: i32) -> (i32, i32, i32) {
    %c0_i32 = arith.constant 0 : i32
    %c0_i32_0 = arith.constant 0 : i32
    return %arg0, %arg1, %c0_i32 : i32, i32, i32
  }
}

</mosaic_0001>

<llo_original>
// kernel: tpu_custom_call.1
$region0: #{tpu_custom_call.1}
  #allocation0 [shape = 'u32[]', space=smem, size = 0x4, offset = 0x4, fixed_abs, tag = 'smem constant byte address 0x4 - core index']
  #allocation1 [shape = 'u32[72,128]{1,0:T(1,128)}', space=vmem, size = 0x9000, scoped, tag = 'internal scratch']
  #allocation2 [shape = 'f32[66,32]{1,0:T(8,128)}', space=vmem, size = 0x9000, scoped, tag = 'scratch operand']
  %s0 = inlined_call_operand.vmem [shape: f32[2,128,32], index: 0, kind: input, shape index: {}]
  %s1 = inlined_call_operand.vmem [shape: f32[2,2,2,32], index: 1, kind: input, shape index: {}]
  %s2 = inlined_call_operand.vmem [shape: f32[3,32,32], index: 2, kind: input, shape index: {}]
  %s3 = inlined_call_operand.vmem [shape: f32[2,128,32], index: 3, kind: output, shape index: {}]
  %s4 = sld [smem:[#allocation0]]
  $region45: #{tpu_custom_call.1} parent=0
    _
  %s6 = ssub.s32 1, %s4
  %s7 = scalar_select 0, %s6, %s4
  loop: start=0, step=1, limit=6
  $region2: #{tpu_custom_call.1} parent=0 // loop_pre_header
    _
  $region3: #{tpu_custom_call.1} parent=0 // loop_header
    %s9 = sphi 0, %s13
    %p10 = scmp.ge.s32.totalorder %s9, 6
    %s16 = sphi 0, %s28
    %s17 = sphi 0, %s24
    %s18 = sphi 0, %s16
    %s19 = sphi 0, %s17
    %s20 = sphi 0, %s18
    %s21 = sphi 0, %s19
    %s33 = sphi 0, %s35
    %s36 = sphi 0, %s33
    %s37 = sphi 0, %s36
    %s53 = sphi 0, %s37
    %s61 = sphi 0, %s63
    %s64 = sphi 0, %s61
    %s65 = sphi 0, %s64
    %s81 = sphi 0, %s65
    %s85 = sphi 0, %s85
    %s87 = sphi 0, %s85
    %s88 = sphi 0, %s87
    %s102 = sphi 0, %s88
    %s110 = sphi 0, %s112
    %s113 = sphi 0, %s110
    %s114 = sphi 0, %s113
    %s130 = sphi 0, %s114
  $region4: #{tpu_custom_call.1} parent=0 // loop_header_branch
    %12 = sbr.rel (%p10) target = $region8
  $region5: #{tpu_custom_call.1} parent=0 // loop_body
    %s14 = ssub.s32 %s9, 1
    %s15 = ssub.s32 %s9, 2
    %s22 = sadd.s32 1, %s17
    %p23 = scmp.ge.s32.totalorder %s22, 2
    %s24 = scalar_select %p23, 0, %s22
    %s25 = sadd.s32 1, %s16
    %s26 = scalar_select %p23, %s25, %s16
    %p27 = scmp.ge.s32.totalorder %s26, 2
    %s28 = scalar_select %p27, 0, %s26
    %s29 = ssub.s32 %s16, %s28
    %s30 = ssub.s32 %s17, %s24
    %s31 = sor.u32 %s29, %s30
    %p32 = scmp.eq.s32.totalorder %s31, 0
    %s34 = sadd.s32 %s33, 1
    %s35 = scalar_select %p32, %s33, %s34
    %p38 = pneg %p32
    %p39 = scmp.eq.s32.totalorder %s9, 3
    %p40 = por %p38, %p39
    %p41 = scmp.ne.s32.totalorder %s33, %s36
    %p42 = scmp.eq.s32.totalorder %s9, 0
    %p43 = por %p41, %p42
    %p44 = scmp.ne.s32.totalorder %s33, %s36
    %p45 = scmp.eq.s32.totalorder %s14, 3
    %p46 = por %p44, %p45
    %p47 = scmp.ne.s32.totalorder %s36, %s37
    %p48 = scmp.eq.s32.totalorder %s14, 0
    %p49 = por %p47, %p48
    %p50 = scmp.ne.s32.totalorder %s36, %s37
    %p51 = scmp.eq.s32.totalorder %s15, 3
    %p52 = por %p50, %p51
    %p54 = scmp.ne.s32.totalorder %s37, %s53
    %p55 = scmp.eq.s32.totalorder %s15, 0
    %p56 = por %p54, %p55
    %s57 = ssub.s32 %s16, %s28
    %s58 = ssub.s32 %s17, %s24
    %s59 = sor.u32 %s57, %s58
    %p60 = scmp.eq.s32.totalorder %s59, 0
    %s62 = sadd.s32 %s61, 1
    %s63 = scalar_select %p60, %s61, %s62
    %p66 = pneg %p60
    %p67 = scmp.eq.s32.totalorder %s9, 3
    %p68 = por %p66, %p67
    %p69 = scmp.ne.s32.totalorder %s61, %s64
    %p70 = scmp.eq.s32.totalorder %s9, 0
    %p71 = por %p69, %p70
    %p72 = scmp.ne.s32.totalorder %s61, %s64
    %p73 = scmp.eq.s32.totalorder %s14, 3
    %p74 = por %p72, %p73
    %p75 = scmp.ne.s32.totalorder %s64, %s65
    %p76 = scmp.eq.s32.totalorder %s14, 0
    %p77 = por %p75, %p76
    %p78 = scmp.ne.s32.totalorder %s64, %s65
    %p79 = scmp.eq.s32.totalorder %s15, 3
    %p80 = por %p78, %p79
    %p82 = scmp.ne.s32.totalorder %s65, %s81
    %p83 = scmp.eq.s32.totalorder %s15, 0
    %p84 = por %p82, %p83
    %s86 = sadd.s32 %s85, 1
    %p89 = scmp.eq.s32.totalorder %s9, 3
    %p90 = scmp.ne.s32.totalorder %s85, %s87
    %p91 = scmp.eq.s32.totalorder %s9, 0
    %p92 = por %p90, %p91
    %p93 = scmp.ne.s32.totalorder %s85, %s87
    %p94 = scmp.eq.s32.totalorder %s14, 3
    %p95 = por %p93, %p94
    %p96 = scmp.ne.s32.totalorder %s87, %s88
    %p97 = scmp.eq.s32.totalorder %s14, 0
    %p98 = por %p96, %p97
    %p99 = scmp.ne.s32.totalorder %s87, %s88
    %p100 = scmp.eq.s32.totalorder %s15, 3
    %p101 = por %p99, %p100
    %p103 = scmp.ne.s32.totalorder %s88, %s102
    %p104 = scmp.eq.s32.totalorder %s15, 0
    %p105 = por %p103, %p104
    %s106 = ssub.s32 %s16, %s28
    %s107 = ssub.s32 %s17, %s24
    %s108 = sor.u32 %s106, %s107
    %p109 = scmp.eq.s32.totalorder %s108, 0
    %s111 = sadd.s32 %s110, 1
    %s112 = scalar_select %p109, %s110, %s111
    %p115 = pneg %p109
    %p116 = scmp.eq.s32.totalorder %s9, 3
    %p117 = por %p115, %p116
    %p118 = scmp.ne.s32.totalorder %s110, %s113
    %p119 = scmp.eq.s32.totalorder %s9, 0
    %p120 = por %p118, %p119
    %p121 = scmp.ne.s32.totalorder %s110, %s113
    %p122 = scmp.eq.s32.totalorder %s14, 3
    %p123 = por %p121, %p122
    %p124 = scmp.ne.s32.totalorder %s113, %s114
    %p125 = scmp.eq.s32.totalorder %s14, 0
    %p126 = por %p124, %p125
    %p127 = scmp.ne.s32.totalorder %s113, %s114
    %p128 = scmp.eq.s32.totalorder %s15, 3
    %p129 = por %p127, %p128
    %p131 = scmp.ne.s32.totalorder %s114, %s130
    %p132 = scmp.eq.s32.totalorder %s15, 0
    %p133 = por %p131, %p132
    %p134 = scmp.le.s32.totalorder 1, %s9
    %p135 = scmp.lt.s32.totalorder %s9, 5
    %p136 = pnand %p134, %p135
    %p137 = pneg %p136
    // Predicated region
    $region9: #{tpu_custom_call.1} parent=5 // pred_check
      _
    $region10: #{tpu_custom_call.1} parent=5 // pred_check_branch
      %139 = sbr.rel (%p136) target = $region12
    $region11: #{tpu_custom_call.1} parent=5 // pred_region
      %s140 = ssub.s32 %s9, 1
      // Predicated region
      $region13: #{tpu_custom_call.1} parent=11 // pred_check
        %p141 = pneg %p98
      $region14: #{tpu_custom_call.1} parent=11 // pred_check_branch
        %143 = sbr.rel (%p141) target = $region16
      $region15: #{tpu_custom_call.1} parent=11 // pred_region
        _
      $region16: #{tpu_custom_call.1} parent=11 // pred_fallthru
        _
    $region12: #{tpu_custom_call.1} parent=5 // pred_fallthru
      _
    %p144 = scmp.lt.s32.totalorder %s9, 4
    // Predicated region
    $region17: #{tpu_custom_call.1} parent=5 // pred_check
      %p145 = pneg %p144
    $region18: #{tpu_custom_call.1} parent=5 // pred_check_branch
      %147 = sbr.rel (%p145) target = $region20
    $region19: #{tpu_custom_call.1} parent=5 // pred_region
      // Predicated region
      $region21: #{tpu_custom_call.1} parent=19 // pred_check
        %p148 = pneg %p43
      $region22: #{tpu_custom_call.1} parent=19 // pred_check_branch
        %150 = sbr.rel (%p148) target = $region24
      $region23: #{tpu_custom_call.1} parent=19 // pred_region
        %s151 = smul.u32 8, %s17
        %p152 = scmp.lt.s32.totalorder %s16, 1
        %s153 = scalar_select %p152, %s16, 1
        %p154 = scmp.lt.s32.totalorder %s151, 15
        %s155 = scalar_select %p154, %s151, 15
        %s156 = smul.addr %s153, 16
        %s157 = sadd.s32 %s155, %s156
        %s158 = smul.addr %s157, 8
        %s159 = scalar_lea.vmem %s0, %s158
        %s160 = smul.u32 8, %s17
      $region24: #{tpu_custom_call.1} parent=19 // pred_fallthru
        _
      // Predicated region
      $region25: #{tpu_custom_call.1} parent=19 // pred_check
        %p161 = pneg %p71
      $region26: #{tpu_custom_call.1} parent=19 // pred_check_branch
        %163 = sbr.rel (%p161) target = $region28
      $region27: #{tpu_custom_call.1} parent=19 // pred_region
        %p164 = scmp.lt.s32.totalorder %s16, 1
        %s165 = scalar_select %p164, %s16, 1
        %p166 = scmp.lt.s32.totalorder %s17, 1
        %s167 = scalar_select %p166, %s17, 1
        %s168 = smul.addr %s165, 2
        %s169 = sadd.s32 %s167, %s168
        %s170 = smul.addr %s169, 2
        %s171 = scalar_lea.vmem %s1, %s170
      $region28: #{tpu_custom_call.1} parent=19 // pred_fallthru
        _
    $region20: #{tpu_custom_call.1} parent=5 // pred_fallthru
      _
    %p172 = scmp.le.s32.totalorder 1, %s9
    %p173 = scmp.lt.s32.totalorder %s9, 5
    %p174 = pnand %p172, %p173
    %p175 = pneg %p174
    // Predicated region
    $region29: #{tpu_custom_call.1} parent=5 // pred_check
      _
    $region30: #{tpu_custom_call.1} parent=5 // pred_check_branch
      %177 = sbr.rel (%p174) target = $region32
    $region31: #{tpu_custom_call.1} parent=5 // pred_region
      %s178 = ssub.s32 %s9, 1
      %s179 = smul.u32 8, %s19
      %p180 = scmp.lt.s32.totalorder %s18, 1
      %s181 = scalar_select %p180, %s18, 1
      %p182 = scmp.lt.s32.totalorder %s179, 15
      %s183 = scalar_select %p182, %s179, 15
      %s184 = smul.addr %s181, 16
      %s185 = sadd.s32 %s183, %s184
      %s186 = smul.addr %s185, 8
      %s187 = scalar_lea.vmem %s0, %s186
      %p188 = pneg %p49
      %p189 = pneg %p46
      %p190 = scmp.lt.s32.totalorder %s18, 1
      %s191 = scalar_select %p190, %s18, 1
      %p192 = scmp.lt.s32.totalorder %s19, 1
      %s193 = scalar_select %p192, %s19, 1
      %s194 = smul.addr %s191, 2
      %s195 = sadd.s32 %s193, %s194
      %s196 = smul.addr %s195, 2
      %s197 = scalar_lea.vmem %s1, %s196
      %p198 = pneg %p77
      %p199 = pneg %p74
      %p200 = pneg %p98
      %p201 = pneg %p95
      %p202 = pneg %p126
      %p203 = pneg %p123
      %s204 = smul.u32 8, %s19
      %p205 = scmp.lt.s32.totalorder %s18, 1
      %s206 = scalar_select %p205, %s18, 1
      %p207 = scmp.lt.s32.totalorder %s204, 15
      %s208 = scalar_select %p207, %s204, 15
      %s209 = smul.addr %s206, 16
      %s210 = sadd.s32 %s208, %s209
      %s211 = smul.addr %s210, 8
      %s212 = scalar_lea.vmem %s3, %s211
      %s213 = smul.u32 8, %s19
      %p214 = scmp.lt.s32.totalorder %s18, 1
      %s215 = scalar_select %p214, %s18, 1
      %p216 = scmp.lt.s32.totalorder %s213, 15
      %s217 = scalar_select %p216, %s213, 15
      %s218 = smul.addr %s215, 16
      %s219 = sadd.s32 %s217, %s218
      %s220 = smul.addr %s219, 8
      %s221 = scalar_lea.vmem %s0, %s220
      %s222 = smul.u32 8, %s19
      %p223 = scmp.lt.s32.totalorder %s18, 1
      %s224 = scalar_select %p223, %s18, 1
      %p225 = scmp.lt.s32.totalorder %s19, 1
      %s226 = scalar_select %p225, %s19, 1
      %s227 = smul.addr %s224, 2
      %s228 = sadd.s32 %s226, %s227
      %s229 = smul.addr %s228, 2
      %s230 = scalar_lea.vmem %s1, %s229
      %s231 = smul.u32 8, %s19
      %p232 = scmp.lt.s32.totalorder %s18, 1
      %s233 = scalar_select %p232, %s18, 1
      %p234 = scmp.lt.s32.totalorder %s231, 15
      %s235 = scalar_select %p234, %s231, 15
      %s236 = smul.addr %s233, 16
      %s237 = sadd.s32 %s235, %s236
      %s238 = smul.addr %s237, 8
      %s239 = scalar_lea.vmem %s3, %s238
      %s240 = smul.u32 8, %s19
      %v241 = vld [vmem:[%s221] sm:$0xff]
      %v242 = vld [vmem:[%s221 + $0x8] sm:$0xff]
      %v243 = vld [vmem:[%s221 + $0x10] sm:$0xff]
      %v244 = vld [vmem:[%s221 + $0x18] sm:$0xff]
      %v245 = vld [vmem:[%s221 + $0x20] sm:$0xff]
      %v246 = vld [vmem:[%s221 + $0x28] sm:$0xff]
      %v247 = vld [vmem:[%s221 + $0x30] sm:$0xff]
      %v248 = vld [vmem:[%s221 + $0x38] sm:$0xff]
      %vm249 = vcmask 261120
      %250 = vst.msk [vmem:[#allocation2 + $0x1] sm:$0xff] %vm249, %v241
      %251 = vst.msk [vmem:[#allocation2 + $0x9] sm:$0xff] %vm249, %v242
      %252 = vst.msk [vmem:[#allocation2 + $0x11] sm:$0xff] %vm249, %v243
      %253 = vst.msk [vmem:[#allocation2 + $0x19] sm:$0xff] %vm249, %v244
      %254 = vst.msk [vmem:[#allocation2 + $0x21] sm:$0xff] %vm249, %v245
      %255 = vst.msk [vmem:[#allocation2 + $0x29] sm:$0xff] %vm249, %v246
      %256 = vst.msk [vmem:[#allocation2 + $0x31] sm:$0xff] %vm249, %v247
      %257 = vst.msk [vmem:[#allocation2 + $0x39] sm:$0xff] %vm249, %v248
      %v258 = vld [vmem:[%s230] sm:$0x3]
      %vm259 = vcmask 253952
      %260 = vst.msk [vmem:[#allocation2] sm:$0x1] %vm259, %v258
      %vm261 = vcmask 254977
      %262 = vst.msk [vmem:[#allocation2 + $0x40] sm:$0x2] %vm261, %v258
      %v263 = vld [vmem:[#allocation2] sm:$0xff]
      %v264 = vld [vmem:[#allocation2 + $0x8] sm:$0xff]
      %v265 = vld [vmem:[#allocation2 + $0x10] sm:$0xff]
      %v266 = vld [vmem:[#allocation2 + $0x18] sm:$0xff]
      %v267 = vld [vmem:[#allocation2 + $0x20] sm:$0xff]
      %v268 = vld [vmem:[#allocation2 + $0x28] sm:$0xff]
      %v269 = vld [vmem:[#allocation2 + $0x30] sm:$0xff]
      %v270 = vld [vmem:[#allocation2 + $0x38] sm:$0xff]
      %v271 = vld [vmem:[%s2] sm:$0xff]
      %v272 = vld [vmem:[%s2 + $0x8] sm:$0xff]
      %v273 = vld [vmem:[%s2 + $0x10] sm:$0xff]
      %v274 = vld [vmem:[%s2 + $0x18] sm:$0xff]
      %v275 = vld [vmem:[#allocation2 + $0x1] sm:$0xff]
      %v276 = vld [vmem:[#allocation2 + $0x9] sm:$0xff]
      %v277 = vld [vmem:[#allocation2 + $0x11] sm:$0xff]
      %v278 = vld [vmem:[#allocation2 + $0x19] sm:$0xff]
      %v279 = vld [vmem:[#allocation2 + $0x21] sm:$0xff]
      %v280 = vld [vmem:[#allocation2 + $0x29] sm:$0xff]
      %v281 = vld [vmem:[#allocation2 + $0x31] sm:$0xff]
      %v282 = vld [vmem:[#allocation2 + $0x39] sm:$0xff]
      %s283 = scalar_lea.vmem %s2, 32
      %v284 = vld [vmem:[%s283] sm:$0xff]
      %v285 = vld [vmem:[%s283 + $0x8] sm:$0xff]
      %v286 = vld [vmem:[%s283 + $0x10] sm:$0xff]
      %v287 = vld [vmem:[%s283 + $0x18] sm:$0xff]
      %v289 = vsel %vm249, %v275, 0
      %v292 = vsel %vm249, %v276, 0
      %v295 = vsel %vm249, %v277, 0
      %v298 = vsel %vm249, %v278, 0
      %v301 = vsel %vm249, %v279, 0
      %v304 = vsel %vm249, %v280, 0
      %v307 = vsel %vm249, %v281, 0
      %v310 = vsel %vm249, %v282, 0
      %312 = vmatpush.msra.mxu0 0.0
      %313 = vmatpush.msra.mxu0 0.0
      %314 = vmatpush.msra.mxu0 0.0
      %315 = vmatpush.msra.mxu0 0.0
      %316 = vmatpush.msra.mxu0 0.0
      %317 = vmatpush.msra.mxu0 0.0
      %318 = vmatpush.msra.mxu0 0.0
      %319 = vmatpush.msra.mxu0 0.0
      %320 = vmatpush.msra.mxu0 0.0
      %321 = vmatpush.msra.mxu0 0.0
      %322 = vmatpush.msra.mxu0 0.0
      %323 = vmatpush.msra.mxu0 0.0
      %324 = vmatpush.msra.mxu0 %v287
      %325 = vmatpush.msra.mxu0 %v286
      %326 = vmatpush.msra.mxu0 %v285
      %327 = vmatpush.msra.mxu0 %v284
      %328 = vmatmul.f32.gmra.mxu0 %v289
      %v329 = vpop.f32.mrf.mxu0
      %v330 = vadd.f32 0.0, %v329
      %331 = vmatmul.f32.gmra.mxu0 %v292
      %v332 = vpop.f32.mrf.mxu0
      %v333 = vadd.f32 0.0, %v332
      %334 = vmatmul.f32.gmra.mxu0 %v295
      %v335 = vpop.f32.mrf.mxu0
      %v336 = vadd.f32 0.0, %v335
      %337 = vmatmul.f32.gmra.mxu0 %v298
      %v338 = vpop.f32.mrf.mxu0
      %v339 = vadd.f32 0.0, %v338
      %340 = vmatmul.f32.gmra.mxu0 %v301
      %v341 = vpop.f32.mrf.mxu0
      %v342 = vadd.f32 0.0, %v341
      %343 = vmatmul.f32.gmra.mxu0 %v304
      %v344 = vpop.f32.mrf.mxu0
      %v345 = vadd.f32 0.0, %v344
      %346 = vmatmul.f32.gmra.mxu0 %v307
      %v347 = vpop.f32.mrf.mxu0
      %v348 = vadd.f32 0.0, %v347
      %349 = vmatmul.f32.gmra.mxu0 %v310
      %v350 = vpop.f32.mrf.mxu0
      %v351 = vadd.f32 0.0, %v350
      %352 = vdwg.mxu0
      %v354 = vsel %vm249, %v263, 0
      %v357 = vsel %vm249, %v264, 0
      %v360 = vsel %vm249, %v265, 0
      %v363 = vsel %vm249, %v266, 0
      %v366 = vsel %vm249, %v267, 0
      %v369 = vsel %vm249, %v268, 0
      %v372 = vsel %vm249, %v269, 0
      %v375 = vsel %vm249, %v270, 0
      %377 = vmatpush.msra.mxu0 0.0
      %378 = vmatpush.msra.mxu0 0.0
      %379 = vmatpush.msra.mxu0 0.0
      %380 = vmatpush.msra.mxu0 0.0
      %381 = vmatpush.msra.mxu0 0.0
      %382 = vmatpush.msra.mxu0 0.0
      %383 = vmatpush.msra.mxu0 0.0
      %384 = vmatpush.msra.mxu0 0.0
      %385 = vmatpush.msra.mxu0 0.0
      %386 = vmatpush.msra.mxu0 0.0
      %387 = vmatpush.msra.mxu0 0.0
      %388 = vmatpush.msra.mxu0 0.0
      %389 = vmatpush.msra.mxu0 %v274
      %390 = vmatpush.msra.mxu0 %v273
      %391 = vmatpush.msra.mxu0 %v272
      %392 = vmatpush.msra.mxu0 %v271
      %393 = vmatmul.f32.gmra.mxu0 %v354
      %v394 = vpop.f32.mrf.mxu0
      %v395 = vadd.f32 %v330, %v394
      %396 = vmatmul.f32.gmra.mxu0 %v357
      %v397 = vpop.f32.mrf.mxu0
      %v398 = vadd.f32 %v333, %v397
      %399 = vmatmul.f32.gmra.mxu0 %v360
      %v400 = vpop.f32.mrf.mxu0
      %v401 = vadd.f32 %v336, %v400
      %402 = vmatmul.f32.gmra.mxu0 %v363
      %v403 = vpop.f32.mrf.mxu0
      %v404 = vadd.f32 %v339, %v403
      %405 = vmatmul.f32.gmra.mxu0 %v366
      %v406 = vpop.f32.mrf.mxu0
      %v407 = vadd.f32 %v342, %v406
      %408 = vmatmul.f32.gmra.mxu0 %v369
      %v409 = vpop.f32.mrf.mxu0
      %v410 = vadd.f32 %v345, %v409
      %411 = vmatmul.f32.gmra.mxu0 %v372
      %v412 = vpop.f32.mrf.mxu0
      %v413 = vadd.f32 %v348, %v412
      %414 = vmatmul.f32.gmra.mxu0 %v375
      %v415 = vpop.f32.mrf.mxu0
      %v416 = vadd.f32 %v351, %v415
      %417 = vdwg.mxu0
      %v418 = vld [vmem:[#allocation2 + $0x2] sm:$0xff]
      %v419 = vld [vmem:[#allocation2 + $0xa] sm:$0xff]
      %v420 = vld [vmem:[#allocation2 + $0x12] sm:$0xff]
      %v421 = vld [vmem:[#allocation2 + $0x1a] sm:$0xff]
      %v422 = vld [vmem:[#allocation2 + $0x22] sm:$0xff]
      %v423 = vld [vmem:[#allocation2 + $0x2a] sm:$0xff]
      %v424 = vld [vmem:[#allocation2 + $0x32] sm:$0xff]
      %v425 = vld [vmem:[#allocation2 + $0x3a] sm:$0xff]
      %s426 = scalar_lea.vmem %s2, 64
      %v427 = vld [vmem:[%s426] sm:$0xff]
      %v428 = vld [vmem:[%s426 + $0x8] sm:$0xff]
      %v429 = vld [vmem:[%s426 + $0x10] sm:$0xff]
      %v430 = vld [vmem:[%s426 + $0x18] sm:$0xff]
      %v432 = vsel %vm249, %v418, 0
      %v435 = vsel %vm249, %v419, 0
      %v438 = vsel %vm249, %v420, 0
      %v441 = vsel %vm249, %v421, 0
      %v444 = vsel %vm249, %v422, 0
      %v447 = vsel %vm249, %v423, 0
      %v450 = vsel %vm249, %v424, 0
      %v453 = vsel %vm249, %v425, 0
      %455 = vmatpush.msra.mxu0 0.0
      %456 = vmatpush.msra.mxu0 0.0
      %457 = vmatpush.msra.mxu0 0.0
      %458 = vmatpush.msra.mxu0 0.0
      %459 = vmatpush.msra.mxu0 0.0
      %460 = vmatpush.msra.mxu0 0.0
      %461 = vmatpush.msra.mxu0 0.0
      %462 = vmatpush.msra.mxu0 0.0
      %463 = vmatpush.msra.mxu0 0.0
      %464 = vmatpush.msra.mxu0 0.0
      %465 = vmatpush.msra.mxu0 0.0
      %466 = vmatpush.msra.mxu0 0.0
      %467 = vmatpush.msra.mxu0 %v430
      %468 = vmatpush.msra.mxu0 %v429
      %469 = vmatpush.msra.mxu0 %v428
      %470 = vmatpush.msra.mxu0 %v427
      %471 = vmatmul.f32.gmra.mxu0 %v432
      %v472 = vpop.f32.mrf.mxu0
      %v473 = vadd.f32 0.0, %v472
      %474 = vmatmul.f32.gmra.mxu0 %v435
      %v475 = vpop.f32.mrf.mxu0
      %v476 = vadd.f32 0.0, %v475
      %477 = vmatmul.f32.gmra.mxu0 %v438
      %v478 = vpop.f32.mrf.mxu0
      %v479 = vadd.f32 0.0, %v478
      %480 = vmatmul.f32.gmra.mxu0 %v441
      %v481 = vpop.f32.mrf.mxu0
      %v482 = vadd.f32 0.0, %v481
      %483 = vmatmul.f32.gmra.mxu0 %v444
      %v484 = vpop.f32.mrf.mxu0
      %v485 = vadd.f32 0.0, %v484
      %486 = vmatmul.f32.gmra.mxu0 %v447
      %v487 = vpop.f32.mrf.mxu0
      %v488 = vadd.f32 0.0, %v487
      %489 = vmatmul.f32.gmra.mxu0 %v450
      %v490 = vpop.f32.mrf.mxu0
      %v491 = vadd.f32 0.0, %v490
      %492 = vmatmul.f32.gmra.mxu0 %v453
      %v493 = vpop.f32.mrf.mxu0
      %v494 = vadd.f32 0.0, %v493
      %495 = vdwg.mxu0
      %v496 = vadd.f32 %v395, %v473
      %v497 = vadd.f32 %v398, %v476
      %v498 = vadd.f32 %v401, %v479
      %v499 = vadd.f32 %v404, %v482
      %v500 = vadd.f32 %v407, %v485
      %v501 = vadd.f32 %v410, %v488
      %v502 = vadd.f32 %v413, %v491
      %v503 = vadd.f32 %v416, %v494
      %504 = vst.msk [vmem:[%s239] sm:$0xff] %vm249, %v496
      %505 = vst.msk [vmem:[%s239 + $0x8] sm:$0xff] %vm249, %v497
      %506 = vst.msk [vmem:[%s239 + $0x10] sm:$0xff] %vm249, %v498
      %507 = vst.msk [vmem:[%s239 + $0x18] sm:$0xff] %vm249, %v499
      %508 = vst.msk [vmem:[%s239 + $0x20] sm:$0xff] %vm249, %v500
      %509 = vst.msk [vmem:[%s239 + $0x28] sm:$0xff] %vm249, %v501
      %510 = vst.msk [vmem:[%s239 + $0x30] sm:$0xff] %vm249, %v502
      %511 = vst.msk [vmem:[%s239 + $0x38] sm:$0xff] %vm249, %v503
      %s512 = smul.u32 8, %s19
      %p513 = scmp.lt.s32.totalorder %s18, 1
      %s514 = scalar_select %p513, %s18, 1
      %p515 = scmp.lt.s32.totalorder %s512, 15
      %s516 = scalar_select %p515, %s512, 15
      %s517 = smul.addr %s514, 16
      %s518 = sadd.s32 %s516, %s517
      %s519 = smul.addr %s518, 8
      %s520 = scalar_lea.vmem %s3, %s519
      // Predicated region
      $region33: #{tpu_custom_call.1} parent=31 // pred_check
        %p521 = pneg %p123
      $region34: #{tpu_custom_call.1} parent=31 // pred_check_branch
        %523 = sbr.rel (%p521) target = $region36
      $region35: #{tpu_custom_call.1} parent=31 // pred_region
        %s524 = smul.u32 8, %s19
      $region36: #{tpu_custom_call.1} parent=31 // pred_fallthru
        _
    $region32: #{tpu_custom_call.1} parent=5 // pred_fallthru
      _
    %p525 = scmp.le.s32.totalorder 2, %s9
    // Predicated region
    $region37: #{tpu_custom_call.1} parent=5 // pred_check
      %p526 = pneg %p525
    $region38: #{tpu_custom_call.1} parent=5 // pred_check_branch
      %528 = sbr.rel (%p526) target = $region40
    $region39: #{tpu_custom_call.1} parent=5 // pred_region
      %s529 = ssub.s32 %s9, 2
      // Predicated region
      $region41: #{tpu_custom_call.1} parent=39 // pred_check
        %p530 = pneg %p129
      $region42: #{tpu_custom_call.1} parent=39 // pred_check_branch
        %532 = sbr.rel (%p530) target = $region44
      $region43: #{tpu_custom_call.1} parent=39 // pred_region
        %s533 = smul.u32 8, %s21
        %p534 = scmp.lt.s32.totalorder %s20, 1
        %s535 = scalar_select %p534, %s20, 1
        %p536 = scmp.lt.s32.totalorder %s533, 15
        %s537 = scalar_select %p536, %s533, 15
        %s538 = smul.addr %s535, 16
        %s539 = sadd.s32 %s537, %s538
        %s540 = smul.addr %s539, 8
        %s541 = scalar_lea.vmem %s3, %s540
      $region44: #{tpu_custom_call.1} parent=39 // pred_fallthru
        _
    $region40: #{tpu_custom_call.1} parent=5 // pred_fallthru
      _
  $region6: #{tpu_custom_call.1} parent=0 // loop_footer
    %s13 = sadd.s32 1, %s9
  $region7: #{tpu_custom_call.1} parent=0 // loop_footer_branch
    %8 = sbr.rel target = $region3
  $region8: #{tpu_custom_call.1} parent=0 // loop_exit
    _

</llo_original>
